<compile_context>
chip_gen: v7x
topology: tpu7x:2x2x1
jax: 0.10.0
libtpu: 0.0.40
codegen_flags: <defaults>
</compile_context>

<pallas_src>
import functools

import jax
import jax.numpy as jnp
from jax import lax
from jax.experimental import pallas as pl
from jax.experimental.pallas import tpu as pltpu

EPS = 1e-5          # BatchNorm1d default eps
SMALL_CIN = 8       # at/below this the contraction stays on the VPU


def _vmem_params():
    """Returns (tile budget bytes, scoped vmem limit bytes) per chip generation.
    v5e/v6e have 128 MiB physical VMEM -> large tiles; v7x only 64 MiB/TC."""
    try:
        vmem_bytes = pltpu.get_tpu_info().vmem_capacity_bytes
    except Exception:
        vmem_bytes = 64 * 1024 * 1024
    if vmem_bytes >= 96 * 1024 * 1024:            # v5e / v6e (128 MiB)
        return 24 * 1024 * 1024, 64 * 1024 * 1024
    return 12 * 1024 * 1024, 32 * 1024 * 1024     # v7x (64 MiB per TC)


def _choose_tiling(n, cin, cout, budget_bytes):
    """Pick (n_tile, n_padded).  Budget counts f32 bytes per lane column:
    double-buffered x and out blocks plus the resident stats partials."""
    gram_cols = cin * cin if cin <= SMALL_CIN else 0
    per_col = 4 * (3 * cin + 2 * cout + gram_cols)
    # Whole N as a single resident tile if it comfortably fits (this also
    # covers small / non-aligned N without any padding or masking).
    if n * per_col <= budget_bytes or n <= 128:
        return n, n
    n_pad128 = ((n + 127) // 128) * 128
    max_tile = max(128, min(n_pad128, (budget_bytes // per_col) // 128 * 128))
    tile = 128
    for cand in range(128, max_tile + 1, 128):
        if n_pad128 % cand == 0:          # prefer no extra padding
            tile = cand
    if tile * 2 < max_tile:
        tile = max_tile                   # awkward divisors: pad the tail instead
    n_padded = ((n + tile - 1) // tile) * tile
    return tile, n_padded


def _stats_kernel(x_ref, sumx_ref, gram_ref, *, cin, use_mxu):
    """Accumulate input moments: lane-parallel sum_x partials + Gram matrix.

    x_ref:    (1, Cin, n_tile) block (N on the lane axis)
    sumx_ref: (Cin, n_tile)    resident output accumulator (lane partials)
    gram_ref: (Cin, Cin, n_tile) lane partials (VPU path) or (Cin, Cin) (MXU)
    """
    is_first = (pl.program_id(0) == 0) & (pl.program_id(1) == 0)

    @pl.when(is_first)
    def _init():
        sumx_ref[...] = jnp.zeros_like(sumx_ref)
        gram_ref[...] = jnp.zeros_like(gram_ref)

    x = x_ref[0].astype(jnp.float32)      # (Cin, n_tile)
    sumx_ref[...] += x                    # pure VPU add, no cross-lane reduce
    if use_mxu:
        # Contraction over the lane axis runs on the MXU (extended slot),
        # keeping the VPU/XLU free; f32 accumulate for accurate variance.
        gram_ref[...] += lax.dot_general(
            x, x, dimension_numbers=(((1,), (1,)), ((), ())),
            preferred_element_type=jnp.float32)
    else:
        # Tiny Cin: Cin^2 broadcast-FMAs into lane-parallel partials; the
        # single cross-lane reduction happens once, outside the kernel.
        for i in range(cin):
            gram_ref[i] += x[i:i + 1, :] * x


def _apply_kernel(x_ref, w_ref, shift_ref, o_ref, *, cin, use_mxu, mxu_bf16):
    """out = relu(W_scaled @ x + shift); BN scale is pre-folded into W_scaled."""
    x = x_ref[0]                  # (Cin, n_tile)
    w = w_ref[...]                # (Cout, Cin), scale already folded in
    if use_mxu:
        if mxu_bf16:
            # bf16-in / f32-accumulate: native MXU width on v6e/v7x.
            # TODO(synk): on v5e keep f32 operands (no bf16 VPU) and size K/N
            # in 128-multiples (4x128x128 MXU) instead of 256-multiples.
            y = jnp.dot(w.astype(jnp.bfloat16), x.astype(jnp.bfloat16),
                        preferred_element_type=jnp.float32)
        else:
            y = jnp.dot(w, x, preferred_element_type=jnp.float32)
    else:
        # Degenerate K=Cin contraction: unrolled broadcast-FMAs on the VPU
        # (the MXU would be >95% idle at K<=8).
        y = w[:, 0:1] * x[0:1, :]
        for i in range(1, cin):
            y = y + w[:, i:i + 1] * x[i:i + 1, :]
    o_ref[0] = jnp.maximum(y + shift_ref[...], 0.0).astype(o_ref.dtype)


def conv_block(x, weight, bias, gamma, beta):
    """x: (B, Cin, N); weight: (Cout, Cin) (PyTorch (Cout, Cin, 1) squeezed);
    bias/gamma/beta: (Cout,). Returns relu(batchnorm(conv1d_k1(x))) with
    BatchNorm1d training-mode batch statistics, matching ConvBlock.forward.

    The Conv1d bias provably cancels under training-mode BatchNorm, so it is
    accepted for API parity but never touches the TPU."""
    del bias
    B, Cin, N = x.shape
    Cout = weight.shape[0]
    x = x.astype(jnp.float32)
    weight = weight.astype(jnp.float32)

    budget, vmem_limit = _vmem_params()
    n_tile, n_pad = _choose_tiling(N, Cin, Cout, budget)
    if n_pad != N:
        # Zero padding keeps sum_x and the Gram matrix exact (stats divide by
        # the true B*N); padded output columns are sliced off at the end.
        # TODO(synk): in-kernel tail masking would avoid this padded copy.
        x = jnp.pad(x, ((0, 0), (0, 0), (0, n_pad - N)))
    nt = n_pad // n_tile
    use_mxu = Cin > SMALL_CIN
    mxu_bf16 = use_mxu and Cin >= 64   # keep f32 where accuracy headroom is thin

    # ---------- kernel A: input moments (sum_x partials + Gram matrix) -------
    # TODO(synk): on v7x give each TensorCore its own partial accumulators
    # (core_map + VMEM_SHARED combine) so the stats pass also uses both cores;
    # kernel B below is already megacore-parallel.
    # TODO(synk): when Cin < 8 and B is large, block several batch elements per
    # grid step to fill all 8 sublanes per vreg and amortize grid-step overhead.
    gram_shape = (Cin, Cin) if use_mxu else (Cin, Cin, n_tile)
    sumx_part, gram_part = pl.pallas_call(
        functools.partial(_stats_kernel, cin=Cin, use_mxu=use_mxu),
        out_shape=(jax.ShapeDtypeStruct((Cin, n_tile), jnp.float32),
                   jax.ShapeDtypeStruct(gram_shape, jnp.float32)),
        grid=(B, nt),
        in_specs=[pl.BlockSpec((1, Cin, n_tile), lambda b, t: (b, 0, t))],
        out_specs=(
            pl.BlockSpec((Cin, n_tile), lambda b, t: (0, 0)),
            pl.BlockSpec(gram_shape, lambda b, t: (0,) * len(gram_shape)),
        ),
        compiler_params=pltpu.CompilerParams(
            dimension_semantics=("arbitrary", "arbitrary"),
            vmem_limit_bytes=vmem_limit,
        ),
    )(x)

    # ---------- glue (tiny, plain JAX): fold BN into scale/shift & weights ---
    m = float(B * N)
    hi = jax.lax.Precision.HIGHEST
    sum_x = jnp.sum(sumx_part, axis=-1)                            # (Cin,)
    gram = gram_part if use_mxu else jnp.sum(gram_part, axis=-1)   # (Cin, Cin)
    mean_x = sum_x / m
    mean_y = jnp.einsum("oi,i->o", weight, mean_x, precision=hi)
    e_y2 = jnp.einsum("oi,ij,oj->o", weight, gram, weight, precision=hi) / m
    var = jnp.maximum(e_y2 - mean_y * mean_y, 0.0)
    scale = gamma.astype(jnp.float32) * lax.rsqrt(var + EPS)
    shift = (beta.astype(jnp.float32) - mean_y * scale).reshape(Cout, 1)
    w_scaled = weight * scale[:, None]

    # ---------- kernel B: relu(W_scaled @ x + shift), fully parallel grid ----
    out = pl.pallas_call(
        functools.partial(_apply_kernel, cin=Cin, use_mxu=use_mxu,
                          mxu_bf16=mxu_bf16),
        out_shape=jax.ShapeDtypeStruct((B, Cout, n_pad), jnp.float32),
        grid=(B, nt),
        in_specs=[
            pl.BlockSpec((1, Cin, n_tile), lambda b, t: (b, 0, t)),
            pl.BlockSpec((Cout, Cin), lambda b, t: (0, 0)),
            pl.BlockSpec((Cout, 1), lambda b, t: (0, 0)),
        ],
        out_specs=pl.BlockSpec((1, Cout, n_tile), lambda b, t: (b, 0, t)),
        compiler_params=pltpu.CompilerParams(
            # No cross-iteration state -> both axes parallel (v7x megacore).
            dimension_semantics=("parallel", "parallel"),
            vmem_limit_bytes=vmem_limit,
        ),
    )(x, w_scaled, shift)

    if n_pad != N:
        out = out[:, :, :N]
    return out


def conv_block_reference(x, weight, bias, gamma, beta):
    """Pure-JAX reference mirroring PyTorch semantics (training-mode BN)."""
    y = jnp.einsum("oi,bin->bon", weight, x,
                   precision=jax.lax.Precision.HIGHEST) + bias.reshape(1, -1, 1)
    mean = jnp.mean(y, axis=(0, 2), keepdims=True)
    var = jnp.mean((y - mean) ** 2, axis=(0, 2), keepdims=True)
    y_hat = (y - mean) / jnp.sqrt(var + EPS)
    out = gamma.reshape(1, -1, 1) * y_hat + beta.reshape(1, -1, 1)
    return jnp.maximum(out, 0.0)


if __name__ == "__main__":
    B, C_IN, C_OUT, N = 2, 4, 8, 16

    key = jax.random.PRNGKey(0)
    kx, kw, kb, kg, kbe = jax.random.split(key, 5)

    x = jax.random.normal(kx, (B, C_IN, N), dtype=jnp.float32)
    # Conv1d(in, out, kernel_size=1) weight (C_out, C_in, 1) stored squeezed.
    weight = jax.random.normal(kw, (C_OUT, C_IN), dtype=jnp.float32) * 0.1
    bias = jax.random.normal(kb, (C_OUT,), dtype=jnp.float32) * 0.1
    # Non-trivial BN affine params to exercise the scale/shift fold.
    gamma = 1.0 + 0.1 * jax.random.normal(kg, (C_OUT,), dtype=jnp.float32)
    beta = 0.1 * jax.random.normal(kbe, (C_OUT,), dtype=jnp.float32)

    out = conv_block(x, weight, bias, gamma, beta)
    out = jax.block_until_ready(out)

    ref = conv_block_reference(x, weight, bias, gamma, beta)
    assert out.shape == (B, C_OUT, N)
    max_err = jnp.max(jnp.abs(out - ref))
    assert jnp.allclose(out, ref, atol=1e-4, rtol=1e-4), (
        f"max abs err = {max_err}")

    print("KERNEL_OK")
</pallas_src>

<mosaic_0001>
module attributes {stable_mosaic.version = 11 : i64} {
  func.func @_stats_kernel(%arg0: i32, %arg1: i32, %arg2: memref<1x4x16xf32, #tpu.memory_space<vmem>>, %arg3: memref<4x16xf32, #tpu.memory_space<vmem>>, %arg4: memref<4x4x16xf32, #tpu.memory_space<vmem>>) attributes {dimension_semantics = [#tpu.dimension_semantics<arbitrary>, #tpu.dimension_semantics<arbitrary>], iteration_bounds = array<i64: 2, 1>, scalar_prefetch = 0 : i64, scratch_operands = 0 : i64, tpu.core_type = #tpu.core_type<tc>, window_params = [{transform_indices = @transform_0, window_bounds = array<i64: 1, 4, 16>}, {pipeline_mode = #tpu.pipeline_mode<synchronous>, transform_indices = @transform_1, window_bounds = array<i64: 4, 16>}, {pipeline_mode = #tpu.pipeline_mode<synchronous>, transform_indices = @transform_2, window_bounds = array<i64: 4, 4, 16>}]} {
    %c0_i32 = arith.constant 0 : i32
    %0 = arith.cmpi eq, %arg0, %c0_i32 : i32
    %c0_i32_0 = arith.constant 0 : i32
    %1 = arith.cmpi eq, %arg1, %c0_i32_0 : i32
    %2 = arith.andi %0, %1 : i1
    %3 = arith.extui %2 : i1 to i32
    %c0_i32_1 = arith.constant 0 : i32
    %4 = arith.cmpi ne, %3, %c0_i32_1 : i32
    scf.if %4 {
      %cst = arith.constant 0.000000e+00 : f32
      %46 = vector.broadcast %cst : f32 to vector<4x16xf32>
      %c0_29 = arith.constant 0 : index
      %c0_30 = arith.constant 0 : index
      %47 = vector.load %arg3[%c0_29, %c0_30] : memref<4x16xf32, #tpu.memory_space<vmem>>, vector<4x16xf32>
      tpu.vector_store %arg3[%c0_29, %c0_30], %46 {strides = array<i32>} : memref<4x16xf32, #tpu.memory_space<vmem>>, vector<4x16xf32>,
      %cst_31 = arith.constant 0.000000e+00 : f32
      %48 = vector.broadcast %cst_31 : f32 to vector<4x4x16xf32>
      %c0_32 = arith.constant 0 : index
      %c0_33 = arith.constant 0 : index
      %c0_34 = arith.constant 0 : index
      %49 = vector.load %arg4[%c0_32, %c0_33, %c0_34] : memref<4x4x16xf32, #tpu.memory_space<vmem>>, vector<4x4x16xf32>
      tpu.vector_store %arg4[%c0_32, %c0_33, %c0_34], %48 {strides = array<i32>} : memref<4x4x16xf32, #tpu.memory_space<vmem>>, vector<4x4x16xf32>,
    } else {
    }
    %c0 = arith.constant 0 : index
    %c0_2 = arith.constant 0 : index
    %c0_3 = arith.constant 0 : index
    %5 = vector.load %arg2[%c0, %c0_2, %c0_3] : memref<1x4x16xf32, #tpu.memory_space<vmem>>, vector<1x4x16xf32>
    %6 = vector.shape_cast %5 : vector<1x4x16xf32> to vector<4x16xf32>
    %c0_4 = arith.constant 0 : index
    %c0_5 = arith.constant 0 : index
    %7 = vector.load %arg3[%c0_4, %c0_5] : memref<4x16xf32, #tpu.memory_space<vmem>>, vector<4x16xf32>
    %8 = arith.addf %7, %6 : vector<4x16xf32>
    %c0_6 = arith.constant 0 : index
    %c0_7 = arith.constant 0 : index
    %9 = vector.load %arg3[%c0_6, %c0_7] : memref<4x16xf32, #tpu.memory_space<vmem>>, vector<4x16xf32>
    tpu.vector_store %arg3[%c0_6, %c0_7], %8 {strides = array<i32>} : memref<4x16xf32, #tpu.memory_space<vmem>>, vector<4x16xf32>,
    %c0_8 = arith.constant 0 : index
    %c0_9 = arith.constant 0 : index
    %c0_10 = arith.constant 0 : index
    %10 = vector.load %arg4[%c0_8, %c0_9, %c0_10] : memref<4x4x16xf32, #tpu.memory_space<vmem>>, vector<1x4x16xf32>
    %11 = vector.shape_cast %10 : vector<1x4x16xf32> to vector<4x16xf32>
    %12 = vector.extract_strided_slice %6 {offsets = [0, 0], sizes = [1, 16], strides = [1, 1]} : vector<4x16xf32> to vector<1x16xf32>
    %13 = vector.broadcast %12 : vector<1x16xf32> to vector<4x16xf32>
    %14 = arith.mulf %13, %6 : vector<4x16xf32>
    %15 = arith.addf %11, %14 : vector<4x16xf32>
    %c0_11 = arith.constant 0 : index
    %c0_12 = arith.constant 0 : index
    %c0_13 = arith.constant 0 : index
    %16 = vector.load %arg4[%c0_11, %c0_12, %c0_13] : memref<4x4x16xf32, #tpu.memory_space<vmem>>, vector<1x4x16xf32>
    %17 = vector.shape_cast %16 : vector<1x4x16xf32> to vector<4x16xf32>
    %18 = vector.shape_cast %15 : vector<4x16xf32> to vector<1x4x16xf32>
    tpu.vector_store %arg4[%c0_11, %c0_12, %c0_13], %18 {strides = array<i32>} : memref<4x4x16xf32, #tpu.memory_space<vmem>>, vector<1x4x16xf32>,
    %c1 = arith.constant 1 : index
    %c0_14 = arith.constant 0 : index
    %c0_15 = arith.constant 0 : index
    %19 = vector.load %arg4[%c1, %c0_14, %c0_15] : memref<4x4x16xf32, #tpu.memory_space<vmem>>, vector<1x4x16xf32>
    %20 = vector.shape_cast %19 : vector<1x4x16xf32> to vector<4x16xf32>
    %21 = vector.extract_strided_slice %6 {offsets = [1, 0], sizes = [1, 16], strides = [1, 1]} : vector<4x16xf32> to vector<1x16xf32>
    %22 = vector.broadcast %21 : vector<1x16xf32> to vector<4x16xf32>
    %23 = arith.mulf %22, %6 : vector<4x16xf32>
    %24 = arith.addf %20, %23 : vector<4x16xf32>
    %c1_16 = arith.constant 1 : index
    %c0_17 = arith.constant 0 : index
    %c0_18 = arith.constant 0 : index
    %25 = vector.load %arg4[%c1_16, %c0_17, %c0_18] : memref<4x4x16xf32, #tpu.memory_space<vmem>>, vector<1x4x16xf32>
    %26 = vector.shape_cast %25 : vector<1x4x16xf32> to vector<4x16xf32>
    %27 = vector.shape_cast %24 : vector<4x16xf32> to vector<1x4x16xf32>
    tpu.vector_store %arg4[%c1_16, %c0_17, %c0_18], %27 {strides = array<i32>} : memref<4x4x16xf32, #tpu.memory_space<vmem>>, vector<1x4x16xf32>,
    %c2 = arith.constant 2 : index
    %c0_19 = arith.constant 0 : index
    %c0_20 = arith.constant 0 : index
    %28 = vector.load %arg4[%c2, %c0_19, %c0_20] : memref<4x4x16xf32, #tpu.memory_space<vmem>>, vector<1x4x16xf32>
    %29 = vector.shape_cast %28 : vector<1x4x16xf32> to vector<4x16xf32>
    %30 = vector.extract_strided_slice %6 {offsets = [2, 0], sizes = [1, 16], strides = [1, 1]} : vector<4x16xf32> to vector<1x16xf32>
    %31 = vector.broadcast %30 : vector<1x16xf32> to vector<4x16xf32>
    %32 = arith.mulf %31, %6 : vector<4x16xf32>
    %33 = arith.addf %29, %32 : vector<4x16xf32>
    %c2_21 = arith.constant 2 : index
    %c0_22 = arith.constant 0 : index
    %c0_23 = arith.constant 0 : index
    %34 = vector.load %arg4[%c2_21, %c0_22, %c0_23] : memref<4x4x16xf32, #tpu.memory_space<vmem>>, vector<1x4x16xf32>
    %35 = vector.shape_cast %34 : vector<1x4x16xf32> to vector<4x16xf32>
    %36 = vector.shape_cast %33 : vector<4x16xf32> to vector<1x4x16xf32>
    tpu.vector_store %arg4[%c2_21, %c0_22, %c0_23], %36 {strides = array<i32>} : memref<4x4x16xf32, #tpu.memory_space<vmem>>, vector<1x4x16xf32>,
    %c3 = arith.constant 3 : index
    %c0_24 = arith.constant 0 : index
    %c0_25 = arith.constant 0 : index
    %37 = vector.load %arg4[%c3, %c0_24, %c0_25] : memref<4x4x16xf32, #tpu.memory_space<vmem>>, vector<1x4x16xf32>
    %38 = vector.shape_cast %37 : vector<1x4x16xf32> to vector<4x16xf32>
    %39 = vector.extract_strided_slice %6 {offsets = [3, 0], sizes = [1, 16], strides = [1, 1]} : vector<4x16xf32> to vector<1x16xf32>
    %40 = vector.broadcast %39 : vector<1x16xf32> to vector<4x16xf32>
    %41 = arith.mulf %40, %6 : vector<4x16xf32>
    %42 = arith.addf %38, %41 : vector<4x16xf32>
    %c3_26 = arith.constant 3 : index
    %c0_27 = arith.constant 0 : index
    %c0_28 = arith.constant 0 : index
    %43 = vector.load %arg4[%c3_26, %c0_27, %c0_28] : memref<4x4x16xf32, #tpu.memory_space<vmem>>, vector<1x4x16xf32>
    %44 = vector.shape_cast %43 : vector<1x4x16xf32> to vector<4x16xf32>
    %45 = vector.shape_cast %42 : vector<4x16xf32> to vector<1x4x16xf32>
    tpu.vector_store %arg4[%c3_26, %c0_27, %c0_28], %45 {strides = array<i32>} : memref<4x4x16xf32, #tpu.memory_space<vmem>>, vector<1x4x16xf32>,
    return
  }
  func.func @transform_0(%arg0: i32, %arg1: i32) -> (i32, i32, i32) {
    %c0_i32 = arith.constant 0 : i32
    %c0_i32_0 = arith.constant 0 : i32
    return %arg0, %c0_i32, %arg1 : i32, i32, i32
  }
  func.func @transform_1(%arg0: i32, %arg1: i32) -> (i32, i32) {
    %c0_i32 = arith.constant 0 : i32
    %c0_i32_0 = arith.constant 0 : i32
    %c0_i32_1 = arith.constant 0 : i32
    return %c0_i32, %c0_i32_0 : i32, i32
  }
  func.func @transform_2(%arg0: i32, %arg1: i32) -> (i32, i32, i32) {
    %c0_i32 = arith.constant 0 : i32
    %c0_i32_0 = arith.constant 0 : i32
    %c0_i32_1 = arith.constant 0 : i32
    %c0_i32_2 = arith.constant 0 : i32
    return %c0_i32, %c0_i32_0, %c0_i32_1 : i32, i32, i32
  }
}

</mosaic_0001>

<llo_original>
// kernel: tpu_custom_call.1
$region0: #{tpu_custom_call.1}
  #allocation0 [shape = 'u32[]', space=smem, size = 0x4, offset = 0x4, fixed_abs, tag = 'smem constant byte address 0x4 - core index']
  #allocation1 [shape = 'u32[144,128]{1,0:T(1,128)}', space=vmem, size = 0x12000, scoped, tag = 'internal scratch']
  %s0 = inlined_call_operand.hbm [shape: f32[2,4,16], index: 0, kind: input, shape index: {}]
  %s1 = inlined_call_operand.hbm [shape: f32[4,16], index: 1, kind: output, shape index: {0}]
  %s2 = inlined_call_operand.hbm [shape: f32[4,4,16], index: 2, kind: output, shape index: {1}]
  %3 = xla_tuple %s1, %s2
  %s4 = sld [smem:[#allocation0]]
  $region53: #{tpu_custom_call.1} parent=0
    _
  %s6 = ssub.s32 1, %s4
  %s7 = scalar_select 0, %s6, %s4
  $region1: #{tpu_custom_call.1} parent=0
    #allocation2 [shape = 'u8[4096]{0}', space=vmem, size = 0x1000, scoped, tag = 'input window, operand 0']
    #allocation3 [shape = 's32[2]{0}', space=sflag, size = 0x8, scoped, tag = 'scoped memory for tpu_custom_call.1']
    #allocation4 [shape = 's32[2]{0}', space=sflag, size = 0x8, scoped, tag = 'scoped memory for tpu_custom_call.1']
    #allocation5 [shape = 'u8[2048]{0}', space=vmem, size = 0x800, scoped, tag = 'output window, operand 0, single buffered']
    #allocation6 [shape = 'u8[8192]{0}', space=vmem, size = 0x2000, scoped, tag = 'output window, operand 1, single buffered']
    #allocation7 [shape = 's32[1]{0}', space=sflag, size = 0x4, scoped, tag = 'scoped memory for tpu_custom_call.1']
    %8 = vsyncpa [#allocation3], 0
    %s9 = scalar_lea.sflag [#allocation3], 1
    %10 = vsyncpa %s9, 0
    %11 = vsyncpa [#allocation4], 0
    %12 = vsyncpa [#allocation7], 0
    loop: start=0, step=1, limit=4
    $region2: #{tpu_custom_call.1} parent=1 // loop_pre_header
      _
    $region3: #{tpu_custom_call.1} parent=1 // loop_header
      %s14 = sphi 0, %s18
      %p15 = scmp.ge.s32.totalorder %s14, 4
      %s21 = sphi 0, %s33
      %s22 = sphi 0, %s29
      %s23 = sphi 0, %s21
      %s24 = sphi 0, %s22
      %s25 = sphi 0, %s23
      %s26 = sphi 0, %s24
      %s38 = sphi 0, %s40
      %s41 = sphi 0, %s38
      %s42 = sphi 0, %s41
      %s58 = sphi 0, %s42
      %s62 = sphi 0, %s62
      %s64 = sphi 0, %s62
      %s65 = sphi 0, %s64
      %s79 = sphi 0, %s65
      %s83 = sphi 0, %s83
      %s85 = sphi 0, %s83
      %s86 = sphi 0, %s85
      %s100 = sphi 0, %s86
    $region4: #{tpu_custom_call.1} parent=1 // loop_header_branch
      %17 = sbr.rel (%p15) target = $region8
    $region5: #{tpu_custom_call.1} parent=1 // loop_body
      %s19 = ssub.s32 %s14, 1
      %s20 = ssub.s32 %s14, 2
      %s27 = sadd.s32 1, %s22
      %p28 = scmp.ge.s32.totalorder %s27, 1
      %s29 = scalar_select %p28, 0, %s27
      %s30 = sadd.s32 1, %s21
      %s31 = scalar_select %p28, %s30, %s21
      %p32 = scmp.ge.s32.totalorder %s31, 2
      %s33 = scalar_select %p32, 0, %s31
      %s34 = ssub.s32 %s21, %s33
      %s35 = ssub.s32 %s22, %s29
      %s36 = sor.u32 %s34, %s35
      %p37 = scmp.eq.s32.totalorder %s36, 0
      %s39 = sadd.s32 %s38, 1
      %s40 = scalar_select %p37, %s38, %s39
      %p43 = pneg %p37
      %p44 = scmp.eq.s32.totalorder %s14, 1
      %p45 = por %p43, %p44
      %p46 = scmp.ne.s32.totalorder %s38, %s41
      %p47 = scmp.eq.s32.totalorder %s14, 0
      %p48 = por %p46, %p47
      %p49 = scmp.ne.s32.totalorder %s38, %s41
      %p50 = scmp.eq.s32.totalorder %s19, 1
      %p51 = por %p49, %p50
      %p52 = scmp.ne.s32.totalorder %s41, %s42
      %p53 = scmp.eq.s32.totalorder %s19, 0
      %p54 = por %p52, %p53
      %p55 = scmp.ne.s32.totalorder %s41, %s42
      %p56 = scmp.eq.s32.totalorder %s20, 1
      %p57 = por %p55, %p56
      %p59 = scmp.ne.s32.totalorder %s42, %s58
      %p60 = scmp.eq.s32.totalorder %s20, 0
      %p61 = por %p59, %p60
      %s63 = sadd.s32 %s62, 1
      %p66 = scmp.eq.s32.totalorder %s14, 1
      %p67 = scmp.ne.s32.totalorder %s62, %s64
      %p68 = scmp.eq.s32.totalorder %s14, 0
      %p69 = por %p67, %p68
      %p70 = scmp.ne.s32.totalorder %s62, %s64
      %p71 = scmp.eq.s32.totalorder %s19, 1
      %p72 = por %p70, %p71
      %p73 = scmp.ne.s32.totalorder %s64, %s65
      %p74 = scmp.eq.s32.totalorder %s19, 0
      %p75 = por %p73, %p74
      %p76 = scmp.ne.s32.totalorder %s64, %s65
      %p77 = scmp.eq.s32.totalorder %s20, 1
      %p78 = por %p76, %p77
      %p80 = scmp.ne.s32.totalorder %s65, %s79
      %p81 = scmp.eq.s32.totalorder %s20, 0
      %p82 = por %p80, %p81
      %s84 = sadd.s32 %s83, 1
      %p87 = scmp.eq.s32.totalorder %s14, 1
      %p88 = scmp.ne.s32.totalorder %s83, %s85
      %p89 = scmp.eq.s32.totalorder %s14, 0
      %p90 = por %p88, %p89
      %p91 = scmp.ne.s32.totalorder %s83, %s85
      %p92 = scmp.eq.s32.totalorder %s19, 1
      %p93 = por %p91, %p92
      %p94 = scmp.ne.s32.totalorder %s85, %s86
      %p95 = scmp.eq.s32.totalorder %s19, 0
      %p96 = por %p94, %p95
      %p97 = scmp.ne.s32.totalorder %s85, %s86
      %p98 = scmp.eq.s32.totalorder %s20, 1
      %p99 = por %p97, %p98
      %p101 = scmp.ne.s32.totalorder %s86, %s100
      %p102 = scmp.eq.s32.totalorder %s20, 0
      %p103 = por %p101, %p102
      %p104 = scmp.le.s32.totalorder 1, %s14
      %p105 = scmp.lt.s32.totalorder %s14, 3
      %p106 = pnand %p104, %p105
      %p107 = pneg %p106
      // Predicated region
      $region9: #{tpu_custom_call.1} parent=5 // pred_check
        _
      $region10: #{tpu_custom_call.1} parent=5 // pred_check_branch
        %109 = sbr.rel (%p106) target = $region12
      $region11: #{tpu_custom_call.1} parent=5 // pred_region
        %s110 = ssub.s32 %s14, 1
      $region12: #{tpu_custom_call.1} parent=5 // pred_fallthru
        _
      %p111 = scmp.lt.s32.totalorder %s14, 2
      // Predicated region
      $region13: #{tpu_custom_call.1} parent=5 // pred_check
        %p112 = pneg %p111
      $region14: #{tpu_custom_call.1} parent=5 // pred_check_branch
        %114 = sbr.rel (%p112) target = $region16
      $region15: #{tpu_custom_call.1} parent=5 // pred_region
        // Predicated region
        $region17: #{tpu_custom_call.1} parent=15 // pred_check
          %p115 = pneg %p48
        $region18: #{tpu_custom_call.1} parent=15 // pred_check_branch
          %117 = sbr.rel (%p115) target = $region20
        $region19: #{tpu_custom_call.1} parent=15 // pred_region
          %s118 = sand.u32 %s38, 1
          %s119 = scalar_lea.sflag [#allocation3], %s118
          %s120 = sand.u32 %s38, 1
          %s121 = smul.addr %s120, 4
          %s122 = scalar_lea.vmem [#allocation2], %s121
          %s124 = ssub.s32 64, 64
          %125 = vsyncadd %s119, %s124
          %s126 = sadd.s32 %s22, %s21
          %s127 = smul.addr %s126, 64
          %s128 = scalar_lea.hbm %s0, %s127
          %s130 = sshll.u32 %s122, 4
          %s131 = int_to_ptr.vmem [resolvable:$true] %s130
          %133 = dma.hbm_to_vmem [thread:$0]  %s128, 64, %s131, %s119
        $region20: #{tpu_custom_call.1} parent=15 // pred_fallthru
          _
      $region16: #{tpu_custom_call.1} parent=5 // pred_fallthru
        _
      %p134 = scmp.le.s32.totalorder 1, %s14
      %p135 = scmp.lt.s32.totalorder %s14, 3
      %p136 = pnand %p134, %p135
      %p137 = pneg %p136
      // Predicated region
      $region21: #{tpu_custom_call.1} parent=5 // pred_check
        _
      $region22: #{tpu_custom_call.1} parent=5 // pred_check_branch
        %139 = sbr.rel (%p136) target = $region24
      $region23: #{tpu_custom_call.1} parent=5 // pred_region
        %s140 = ssub.s32 %s14, 1
        %s141 = sand.u32 %s41, 1
        %s142 = scalar_lea.sflag [#allocation3], %s141
        %s143 = sand.u32 %s41, 1
        %s144 = smul.addr %s143, 4
        %s145 = scalar_lea.vmem [#allocation2], %s144
        // Predicated region
        $region25: #{tpu_custom_call.1} parent=23 // pred_check
          %p146 = pneg %p54
        $region26: #{tpu_custom_call.1} parent=23 // pred_check_branch
          %148 = sbr.rel (%p146) target = $region28
        $region27: #{tpu_custom_call.1} parent=23 // pred_region
          %149 = dma.done %s142, 64
        $region28: #{tpu_custom_call.1} parent=23 // pred_fallthru
          _
        %s150 = sand.u32 %s41, 1
        %s151 = scalar_lea.sflag [#allocation3], %s150
        %s152 = sand.u32 %s41, 1
        %s153 = smul.addr %s152, 4
        %s154 = scalar_lea.vmem [#allocation2], %s153
        %p155 = pneg %p54
        %p156 = pneg %p51
        %p157 = pneg %p75
        %p158 = pneg %p72
        %p159 = pneg %p96
        %p160 = pneg %p93
        %p161 = scmp.eq.s32.totalorder %s23, 0
        %p162 = scmp.eq.s32.totalorder %s24, 0
        %p163 = pnand %p161, %p162
        %p164 = pneg %p163
        // Predicated region
        $region29: #{tpu_custom_call.1} parent=23 // pred_check
          _
        $region30: #{tpu_custom_call.1} parent=23 // pred_check_branch
          %166 = sbr.rel (%p163) target = $region32
        $region31: #{tpu_custom_call.1} parent=23 // pred_region
          %vm167 = vcmask 125952
          %168 = vst.msk [vmem:[#allocation5] sm:$0xf] %vm167, 0.0
          %169 = vst.msk [vmem:[#allocation6] sm:$0xf] %vm167, 0.0
          %170 = vst.msk [vmem:[#allocation6 + $0x4] sm:$0xf] %vm167, 0.0
          %171 = vst.msk [vmem:[#allocation6 + $0x8] sm:$0xf] %vm167, 0.0
          %172 = vst.msk [vmem:[#allocation6 + $0xc] sm:$0xf] %vm167, 0.0
        $region32: #{tpu_custom_call.1} parent=23 // pred_fallthru
          _
        %v173 = vld [vmem:[%s145] sm:$0xf]
        %v174 = vld [vmem:[#allocation5] sm:$0xf]
        %v175 = vadd.f32 %v174, %v173
        %vm176 = vcmask 125952
        %177 = vst.msk [vmem:[#allocation5] sm:$0xf] %vm176, %v175
        %v178 = vld [vmem:[#allocation6] sm:$0xf]
        %v179 = vlaneseq
        %v180 = vshrl.u32 %v179, 7
        %v181 = vsub.s32 0, %v180
        %v182 = vrot.slane %v173, %v181
        %v183 = vmul.f32 %v182, %v173
        %v184 = vadd.f32 %v178, %v183
        %185 = vst.msk [vmem:[#allocation6] sm:$0xf] %vm176, %v184
        %s186 = scalar_lea.vmem [#allocation6], 4
        %v187 = vld [vmem:[%s186] sm:$0xf]
        %v188 = vlaneseq
        %v189 = vshrl.u32 %v188, 7
        %v190 = vsub.s32 1, %v189
        %v191 = vrot.slane %v173, %v190
        %v192 = vmul.f32 %v191, %v173
        %v193 = vadd.f32 %v187, %v192
        %194 = vst.msk [vmem:[%s186] sm:$0xf] %vm176, %v193
        %s195 = scalar_lea.vmem [#allocation6], 8
        %v196 = vld [vmem:[%s195] sm:$0xf]
        %v197 = vlaneseq
        %v198 = vshrl.u32 %v197, 7
        %v199 = vsub.s32 2, %v198
        %v200 = vrot.slane %v173, %v199
        %v201 = vmul.f32 %v200, %v173
        %v202 = vadd.f32 %v196, %v201
        %203 = vst.msk [vmem:[%s195] sm:$0xf] %vm176, %v202
        %s204 = scalar_lea.vmem [#allocation6], 12
        %v205 = vld [vmem:[%s204] sm:$0xf]
        %v206 = vlaneseq
        %v207 = vshrl.u32 %v206, 7
        %v208 = vsub.s32 3, %v207
        %v209 = vrot.slane %v173, %v208
        %v210 = vmul.f32 %v209, %v173
        %v211 = vadd.f32 %v205, %v210
        %212 = vst.msk [vmem:[%s204] sm:$0xf] %vm176, %v211
        // Predicated region
        $region33: #{tpu_custom_call.1} parent=23 // pred_check
          %p213 = pneg %p72
        $region34: #{tpu_custom_call.1} parent=23 // pred_check_branch
          %215 = sbr.rel (%p213) target = $region36
        $region35: #{tpu_custom_call.1} parent=23 // pred_region
          %s217 = ssub.s32 64, 64
          %218 = vsyncadd [#allocation4], %s217
          %s220 = sshll.u32 [#allocation5], 4
          %s221 = int_to_ptr.vmem [resolvable:$true] %s220
          %223 = dma.vmem_to_hbm [thread:$0]  %s221, 64, %s1, [#allocation4]
        $region36: #{tpu_custom_call.1} parent=23 // pred_fallthru
          _
        // Predicated region
        $region37: #{tpu_custom_call.1} parent=23 // pred_check
          %p224 = pneg %p93
        $region38: #{tpu_custom_call.1} parent=23 // pred_check_branch
          %226 = sbr.rel (%p224) target = $region40
        $region39: #{tpu_custom_call.1} parent=23 // pred_region
          %s228 = ssub.s32 256, 256
          %229 = vsyncadd [#allocation7], %s228
          %s230 = sshll.u32 [#allocation6], 4
          %s231 = int_to_ptr.vmem [resolvable:$true] %s230
          %236 = dma.vmem_to_hbm [thread:$0]  %s231, 256, %s2, [#allocation7], 64, 64, 4
        $region40: #{tpu_custom_call.1} parent=23 // pred_fallthru
          _
        // Predicated region
        $region41: #{tpu_custom_call.1} parent=23 // pred_check
          %p237 = pneg %p72
        $region42: #{tpu_custom_call.1} parent=23 // pred_check_branch
          %239 = sbr.rel (%p237) target = $region44
        $region43: #{tpu_custom_call.1} parent=23 // pred_region
          %240 = dma.done [#allocation4], 64
        $region44: #{tpu_custom_call.1} parent=23 // pred_fallthru
          _
        // Predicated region
        $region45: #{tpu_custom_call.1} parent=23 // pred_check
          %p241 = pneg %p93
        $region46: #{tpu_custom_call.1} parent=23 // pred_check_branch
          %243 = sbr.rel (%p241) target = $region48
        $region47: #{tpu_custom_call.1} parent=23 // pred_region
          %244 = dma.done [#allocation7], 256
        $region48: #{tpu_custom_call.1} parent=23 // pred_fallthru
          _
      $region24: #{tpu_custom_call.1} parent=5 // pred_fallthru
        _
      %p245 = scmp.le.s32.totalorder 2, %s14
      // Predicated region
      $region49: #{tpu_custom_call.1} parent=5 // pred_check
        %p246 = pneg %p245
      $region50: #{tpu_custom_call.1} parent=5 // pred_check_branch
        %248 = sbr.rel (%p246) target = $region52
      $region51: #{tpu_custom_call.1} parent=5 // pred_region
        %s249 = ssub.s32 %s14, 2
      $region52: #{tpu_custom_call.1} parent=5 // pred_fallthru
        _
    $region6: #{tpu_custom_call.1} parent=1 // loop_footer
      %s18 = sadd.s32 1, %s14
    $region7: #{tpu_custom_call.1} parent=1 // loop_footer_branch
      %13 = sbr.rel target = $region3
    $region8: #{tpu_custom_call.1} parent=1 // loop_exit
      _
    %250 = vsyncpa [#allocation3], 1
    %s251 = scalar_lea.sflag [#allocation3], 1
    %252 = vsyncpa %s251, 1
    %253 = vsyncpa [#allocation4], 1
    %s254 = scalar_lea.sflag [#allocation4], 1
    %255 = vsyncpa %s254, 1
    %256 = vsyncpa [#allocation7], 1

</llo_original>
